<compile_context>
chip_gen: v6e
topology: v6e:2x2x1
jax: 0.10.0
libtpu: 0.0.40
codegen_flags: <defaults>
</compile_context>

<pallas_src>
import math

import numpy as np
import jax
import jax.numpy as jnp
from jax import lax
from jax.experimental import pallas as pl
from jax.experimental.pallas import tpu as pltpu
from jax.scipy.special import erf


# ------------------------------- small utils --------------------------------
def _round_up(n, m):
    return ((n + m - 1) // m) * m


def _pad_rows(x, n_pad):
    n = x.shape[0]
    return x if n == n_pad else jnp.pad(x, ((0, n_pad - n), (0, 0)))


def _row_spec(tm, width):
    return pl.BlockSpec((tm, width), lambda i: (i, 0))


def _resident(shape):
    # weights / biases / LN params: same block for every grid step -> stay in VMEM.
    return pl.BlockSpec(shape, lambda i: (0,) * len(shape))


_ROW_PARAMS = pltpu.CompilerParams(
    dimension_semantics=("parallel",), vmem_limit_bytes=32 * 1024 * 1024)


def _erf_approx(x):
    # Abramowitz & Stegun 7.1.26 (|err| < 1.5e-7), built only from ops guaranteed to
    # lower in Mosaic (abs/exp/mul/add/where). Matches torch's exact-erf nn.GELU to
    # far below the test tolerance.
    a1, a2, a3, a4, a5 = 0.254829592, -0.284496736, 1.421413741, -1.453152027, 1.061405429
    pconst = 0.3275911
    ax = jnp.abs(x)
    t = 1.0 / (1.0 + pconst * ax)
    poly = ((((a5 * t + a4) * t + a3) * t + a2) * t + a1) * t
    y = 1.0 - poly * jnp.exp(-ax * ax)
    return jnp.where(x < 0, -y, y)


def _gelu_exact(x):
    return 0.5 * x * (1.0 + _erf_approx(x * 0.7071067811865476))


# --------------------------- Rotary3D (cheap glue) ---------------------------
def rope3d_cos_sin(xyz, head_dim):
    """Mirrors RotaryPositionEncoding3D.forward with feature_dim = head_dim.
    Returns cos/sin of shape (N, head_dim); head_dim must be divisible by 6."""
    d3 = head_dim // 3
    freqs = jnp.exp(jnp.arange(0, d3, 2, dtype=jnp.float32) * (-math.log(10000.0) / d3))

    def one_axis(pos):                             # pos: (N, 1)
        ang = pos * freqs[None, :]                 # (N, F)
        dup = lambda t: jnp.stack([t, t], axis=-1).reshape(t.shape[0], -1)  # (N, 2F)
        return dup(jnp.cos(ang)), dup(jnp.sin(ang))

    cx, sx = one_axis(xyz[:, 0:1])
    cy, sy = one_axis(xyz[:, 1:2])
    cz, sz = one_axis(xyz[:, 2:3])
    return jnp.concatenate([cx, cy, cz], -1), jnp.concatenate([sx, sy, sz], -1)


def make_pair_swap(c):
    """(C,C) matrix R with (x @ R)[2i] = -x[2i+1], (x @ R)[2i+1] = x[2i]:
    the interleaved rotary pair swap as a linear map (folded into Wq host-side)."""
    r = np.zeros((c, c), np.float32)
    idx = np.arange(0, c, 2)
    r[idx + 1, idx] = -1.0
    r[idx, idx + 1] = 1.0
    return jnp.asarray(r)


# ------------------------------ Pallas kernels -------------------------------
def _q_rope_kernel(x_ref, cos_ref, sin_ref, g_ref, b_ref, wqc_ref, bqc_ref, o_ref):
    # LayerNorm1 (f32) -> one bf16 matmul against [scale*Wq | scale*Wq@R] -> rotary mix.
    c = o_ref.shape[-1]
    x = x_ref[...]
    mu = jnp.mean(x, axis=-1, keepdims=True)
    var = jnp.mean((x - mu) ** 2, axis=-1, keepdims=True)
    xn = (x - mu) * lax.rsqrt(var + 1e-5) * g_ref[...] + b_ref[...]
    qc = jnp.dot(xn.astype(jnp.bfloat16), wqc_ref[...],
                 preferred_element_type=jnp.float32) + bqc_ref[...]
    q, q_sw = qc[:, :c], qc[:, c:]
    o = q * cos_ref[...].astype(jnp.float32) + q_sw * sin_ref[...].astype(jnp.float32)
    o_ref[...] = o.astype(o_ref.dtype)


def _kv_kernel(x_ref, wkv_ref, bkv_ref, kv_ref):
    # kv = point.feat @ [Wk | Wv]; no LayerNorm and no rotation on k (see header note).
    kv = jnp.dot(x_ref[...], wkv_ref[...],
                 preferred_element_type=jnp.float32) + bkv_ref[...]
    kv_ref[...] = kv.astype(kv_ref.dtype)


def _proj_ffn_kernel(att_ref, res_ref, wp_ref, bp_ref, g_ref, b_ref,
                     w1_ref, b1_ref, w2_ref, b2_ref, o_ref):
    # output projection + residual + LayerNorm2 + MLP(GELU) + residual, fully fused.
    a = jnp.dot(att_ref[...], wp_ref[...],
                preferred_element_type=jnp.float32) + bp_ref[...]
    x1 = res_ref[...] + a
    mu = jnp.mean(x1, axis=-1, keepdims=True)
    var = jnp.mean((x1 - mu) ** 2, axis=-1, keepdims=True)
    y = (x1 - mu) * lax.rsqrt(var + 1e-5) * g_ref[...] + b_ref[...]
    h = jnp.dot(y.astype(jnp.bfloat16), w1_ref[...],
                preferred_element_type=jnp.float32) + b1_ref[...]
    h = _gelu_exact(h)
    z = jnp.dot(h.astype(jnp.bfloat16), w2_ref[...],
                preferred_element_type=jnp.float32) + b2_ref[...]
    o_ref[...] = (x1 + z).astype(o_ref.dtype)


# ---------------------------- pallas_call wrappers ---------------------------
def _tile_rows(n, block_rows):
    tm = min(block_rows, _round_up(n, 16))       # 16-row multiple (bf16 sublane tile)
    return tm, _round_up(n, tm)


def _q_rope_call(x, cos_q, sin_q, ln1_g, ln1_b, wq_cat, bq_cat, block_rows):
    n, c = x.shape
    tm, n_pad = _tile_rows(n, block_rows)
    out = pl.pallas_call(
        _q_rope_kernel,
        out_shape=jax.ShapeDtypeStruct((n_pad, c), jnp.bfloat16),
        grid=(n_pad // tm,),
        in_specs=[_row_spec(tm, c), _row_spec(tm, c), _row_spec(tm, c),
                  _resident((1, c)), _resident((1, c)),          # LN1 gamma/beta
                  _resident((c, 2 * c)), _resident((1, 2 * c))],  # [Wq|WqR], bias
        out_specs=_row_spec(tm, c),
        compiler_params=_ROW_PARAMS,
    )(_pad_rows(x, n_pad), _pad_rows(cos_q, n_pad), _pad_rows(sin_q, n_pad),
      ln1_g, ln1_b, wq_cat, bq_cat)
    return out[:n]


def _kv_call(x_bf16, wkv, bkv, block_rows):
    n, c = x_bf16.shape
    tm, n_pad = _tile_rows(n, block_rows)
    out = pl.pallas_call(
        _kv_kernel,
        out_shape=jax.ShapeDtypeStruct((n_pad, 2 * c), jnp.bfloat16),
        grid=(n_pad // tm,),
        in_specs=[_row_spec(tm, c),
                  _resident((c, 2 * c)), _resident((1, 2 * c))],
        out_specs=_row_spec(tm, 2 * c),
        compiler_params=_ROW_PARAMS,
    )(_pad_rows(x_bf16, n_pad), wkv, bkv)
    return out[:n]


def _attention_call(klen, q_pack, kv_pack, num_heads):
    # q_pack: (B, LQ, C) bf16; kv_pack: (B, LK, 2C) bf16 (k then v on lanes);
    # klen: (B,) valid kv count per batch.  Softmax scale is pre-folded into q.
    b, lq, c = q_pack.shape
    lk = kv_pack.shape[1]
    d = c // num_heads

    def attn_kernel(klen_ref, q_ref, kv_ref, o_ref):
        bi = pl.program_id(0)
        q = q_ref[0]                                   # (tq, C)  bf16
        kv = kv_ref[0]                                 # (LK, 2C) bf16
        kidx = lax.broadcasted_iota(jnp.int32, (1, lk), 1)
        bias = jnp.where(kidx < klen_ref[bi], 0.0, -1e30)   # (1, LK) additive key mask
        heads = []
        for h in range(num_heads):                     # static unroll (num_heads small)
            qh = q[:, h * d:(h + 1) * d]
            kh = kv[:, h * d:(h + 1) * d]
            vh = kv[:, c + h * d:c + (h + 1) * d]
            # lane-dense logits (tq, LK); f32 accumulation on the MXU
            s = lax.dot_general(qh, kh, (((1,), (1,)), ((), ())),
                                preferred_element_type=jnp.float32) + bias
            m = jnp.max(s, axis=-1, keepdims=True)
            e = jnp.exp(s - m)
            oh = jnp.dot(e.astype(jnp.bfloat16), vh, preferred_element_type=jnp.float32)
            denom = jnp.sum(e, axis=-1, keepdims=True)
            heads.append(oh * pl.reciprocal(denom, approx=True))   # EUP slot
        # single lane-dense (tq, C) store with heads concatenated on lanes
        o_ref[0] = jnp.concatenate(heads, axis=-1).astype(o_ref.dtype)

    tq = lq if lq <= 128 else 128                      # caller pads lq to a tq multiple
    gs = pltpu.PrefetchScalarGridSpec(
        num_scalar_prefetch=1, grid=(b, lq // tq),
        in_specs=[pl.BlockSpec((1, tq, c), lambda bi, qi, kl: (bi, qi, 0)),
                  pl.BlockSpec((1, lk, 2 * c), lambda bi, qi, kl: (bi, 0, 0))],
        out_specs=pl.BlockSpec((1, tq, c), lambda bi, qi, kl: (bi, qi, 0)))
    return pl.pallas_call(
        attn_kernel,
        out_shape=jax.ShapeDtypeStruct((b, lq, c), jnp.bfloat16),
        grid_spec=gs,
        compiler_params=pltpu.CompilerParams(
            dimension_semantics=("parallel", "parallel"),   # (batch, q-tiles): v7x 2-TC
            vmem_limit_bytes=32 * 1024 * 1024),
    )(klen, q_pack, kv_pack)


def _proj_ffn_call(att, resid, pw, block_rows):
    n, c = att.shape
    hid = pw["w1"].shape[1]
    tm, n_pad = _tile_rows(n, block_rows)
    out = pl.pallas_call(
        _proj_ffn_kernel,
        out_shape=jax.ShapeDtypeStruct((n_pad, c), jnp.float32),
        grid=(n_pad // tm,),
        in_specs=[_row_spec(tm, c), _row_spec(tm, c),
                  _resident((c, c)), _resident((1, c)),        # proj
                  _resident((1, c)), _resident((1, c)),        # LN2 gamma/beta
                  _resident((c, hid)), _resident((1, hid)),    # fc1 (hid padded to 128x)
                  _resident((hid, c)), _resident((1, c))],     # fc2
        out_specs=_row_spec(tm, c),
        compiler_params=_ROW_PARAMS,
    )(_pad_rows(att, n_pad), _pad_rows(resid, n_pad),
      pw["wp"], pw["bp"], pw["ln2_g"], pw["ln2_b"],
      pw["w1"], pw["b1"], pw["w2"], pw["b2"])
    return out[:n]


# -------------------------- host-side varlen glue ----------------------------
# TODO(synk): replace with packed varlen attention (scalar-prefetched cu_seqlens +
#   in-kernel DMA of the packed (N, C) tensors, flash-style KV tiling).
def _pack_by_batch(x, lens, lmax):
    segs, s = [], 0
    for l in lens:
        segs.append(jnp.pad(x[s:s + l], ((0, lmax - l), (0, 0))))
        s += l
    return jnp.stack(segs, axis=0)


def _unpack_by_batch(xb, lens):
    return jnp.concatenate([xb[i, :l] for i, l in enumerate(lens)], axis=0)


# ------------------------------- full forward --------------------------------
def neckblock_forward(anchor_feat, anchor_coord, point_feat, point_coord,
                      anchor_lens, point_lens, params, *, num_heads, block_rows=512):
    n_a, c = anchor_feat.shape
    h = num_heads
    d = c // h
    block_rows = _round_up(block_rows, 16)
    scale = d ** -0.5

    # --- host-side weight prep (one-time, exact folds) ---
    # q projection: fold rotary pair-swap and softmax scale into the weights:
    #   scale*rope(x Wq + bq) = (x [s*Wq | s*Wq@R] + [s*bq | s*bq@R]) -> split -> *cos + *sin
    rot = make_pair_swap(c)
    wq_cat = (scale * jnp.concatenate([params["wq"], params["wq"] @ rot], axis=1)
              ).astype(jnp.bfloat16)
    bq_cat = scale * jnp.concatenate([params["bq"], params["bq"] @ rot], axis=1)
    # k/v projection fused into one (C, 2C) matmul
    wkv = jnp.concatenate([params["wk"], params["wv"]], axis=1).astype(jnp.bfloat16)
    bkv = jnp.concatenate([params["bk"], params["bv"]], axis=1)
    # MLP hidden padded to a lane-dense multiple of 128 (zero cols/rows -> exact)
    hid = params["w1"].shape[1]
    hid_p = _round_up(hid, 128)
    pw = dict(wp=params["wp"].astype(jnp.bfloat16), bp=params["bp"],
              ln2_g=params["ln2_g"], ln2_b=params["ln2_b"],
              w1=jnp.pad(params["w1"], ((0, 0), (0, hid_p - hid))).astype(jnp.bfloat16),
              b1=jnp.pad(params["b1"], ((0, 0), (0, hid_p - hid))),
              w2=jnp.pad(params["w2"], ((0, hid_p - hid), (0, 0))).astype(jnp.bfloat16),
              b2=params["b2"])

    # Rotary tables for q, streamed in bf16 (halves that part of K1's HBM read).
    cos_q, sin_q = rope3d_cos_sin(anchor_coord, d)          # (Na, D)
    cos_q = jnp.tile(cos_q, (1, h)).astype(jnp.bfloat16)    # (Na, C)
    sin_q = jnp.tile(sin_q, (1, h)).astype(jnp.bfloat16)

    # K1: LayerNorm1 + q projection + Rotary3D(q) -> bf16
    q_rot = _q_rope_call(anchor_feat, cos_q, sin_q,
                         params["ln1_g"], params["ln1_b"], wq_cat, bq_cat, block_rows)

    # K2: fused k/v projections (k kept un-rotated, matching the reference code) -> bf16
    kv_all = _kv_call(point_feat.astype(jnp.bfloat16), wkv, bkv, block_rows)

    # varlen -> padded (B, L, C/2C); heads stay concatenated on lanes (no transposes)
    lq = _round_up(max(anchor_lens), 16)
    if lq > 128:
        lq = _round_up(lq, 128)
    lk = _round_up(max(point_lens), 16)
    q_pack = _pack_by_batch(q_rot, anchor_lens, lq)          # (B, LQ, C)  bf16
    kv_pack = _pack_by_batch(kv_all, point_lens, lk)         # (B, LK, 2C) bf16

    # K3: masked per-batch cross attention (kv lengths scalar-prefetched to SMEM)
    klen = jnp.array(point_lens, dtype=jnp.int32)
    ob = _attention_call(klen, q_pack, kv_pack, h)           # (B, LQ, C) bf16
    att = _unpack_by_batch(ob, anchor_lens)                  # (Na, C)    bf16

    # K4: proj + residual + LayerNorm2 + MLP(GELU) + residual -> f32
    return _proj_ffn_call(att, anchor_feat, pw, block_rows)


# --------------------------- params & JAX reference --------------------------
def init_params(key, c, hid):
    ks = jax.random.split(key, 16)
    g = lambda k, shape, s: s * jax.random.normal(k, shape, dtype=jnp.float32)
    # Linear weights stored as (in, out), i.e. transposed vs torch's (out, in).
    return dict(
        ln1_g=1.0 + 0.1 * jax.random.normal(ks[0], (1, c), dtype=jnp.float32),
        ln1_b=0.05 * jax.random.normal(ks[1], (1, c), dtype=jnp.float32),
        wq=g(ks[2], (c, c), 0.1), bq=g(ks[3], (1, c), 0.05),
        wk=g(ks[4], (c, c), 0.1), bk=g(ks[5], (1, c), 0.05),
        wv=g(ks[6], (c, c), 0.1), bv=g(ks[7], (1, c), 0.05),
        wp=g(ks[8], (c, c), 0.1), bp=g(ks[9], (1, c), 0.05),
        ln2_g=1.0 + 0.1 * jax.random.normal(ks[10], (1, c), dtype=jnp.float32),
        ln2_b=0.05 * jax.random.normal(ks[11], (1, c), dtype=jnp.float32),
        w1=g(ks[12], (c, hid), 0.1), b1=g(ks[13], (1, hid), 0.05),
        w2=g(ks[14], (hid, c), 0.1), b2=g(ks[15], (1, c), 0.05),
    )


def reference_neckblock(anchor_feat, anchor_coord, point_feat, point_coord,
                        anchor_lens, point_lens, p, num_heads):
    c = anchor_feat.shape[1]
    h = num_heads
    d = c // h
    ln = lambda x, g, b: (x - x.mean(-1, keepdims=True)) / jnp.sqrt(
        x.var(-1, keepdims=True) + 1e-5) * g + b

    xq = ln(anchor_feat, p["ln1_g"], p["ln1_b"])
    q = (xq @ p["wq"] + p["bq"]).reshape(-1, h, d)
    k = (point_feat @ p["wk"] + p["bk"]).reshape(-1, h, d)
    v = (point_feat @ p["wv"] + p["bv"]).reshape(-1, h, d)

    # Rotary3D on q only (the torch code discards its rotated k -- see header).
    cos_q, sin_q = rope3d_cos_sin(anchor_coord, d)
    q2 = jnp.stack([-q[..., 1::2], q[..., ::2]], axis=-1).reshape(q.shape)
    q = q * cos_q[:, None, :] + q2 * sin_q[:, None, :]

    scale = d ** -0.5
    outs, a0, p0 = [], 0, 0
    for la, lp in zip(anchor_lens, point_lens):
        qb, kb, vb = q[a0:a0 + la], k[p0:p0 + lp], v[p0:p0 + lp]
        logits = jnp.einsum("qhd,khd->qkh", qb, kb) * scale
        attnw = jax.nn.softmax(logits, axis=1)
        outs.append(jnp.einsum("qkh,khd->qhd", attnw, vb).reshape(la, c))
        a0, p0 = a0 + la, p0 + lp
    att = jnp.concatenate(outs, axis=0)

    x1 = anchor_feat + (att @ p["wp"] + p["bp"])
    y = ln(x1, p["ln2_g"], p["ln2_b"])
    hdn = y @ p["w1"] + p["b1"]
    hdn = 0.5 * hdn * (1.0 + erf(hdn / math.sqrt(2.0)))     # exact GELU (torch default)
    return x1 + (hdn @ p["w2"] + p["b2"])


# ----------------------------------- driver ----------------------------------
if __name__ == "__main__":
    key = jax.random.PRNGKey(0)

    C, H = 48, 4                     # head_dim = 12 (must be divisible by 6 for Rotary3D)
    HID = int(C * 4.0)               # mlp_ratio = 4.0 (padded to 256 lanes inside)
    anchor_lens = (6, 10)            # per-batch anchor (query) counts    -> Na = 16
    point_lens = (12, 20)            # per-batch point (key/value) counts -> Np = 32
    na, npnt = sum(anchor_lens), sum(point_lens)

    ks = jax.random.split(key, 5)
    anchor_feat = jax.random.normal(ks[0], (na, C), dtype=jnp.float32)
    anchor_coord = 2.0 * jax.random.uniform(ks[1], (na, 3), dtype=jnp.float32)
    point_feat = jax.random.normal(ks[2], (npnt, C), dtype=jnp.float32)
    point_coord = 2.0 * jax.random.uniform(ks[3], (npnt, 3), dtype=jnp.float32)
    params = init_params(ks[4], C, HID)

    # block_rows=16 just to exercise multi-tile row pipelining at toy N; use 512-1024
    # (re-derived against the per-generation VMEM budget) at real point-cloud sizes.
    out = neckblock_forward(anchor_feat, anchor_coord, point_feat, point_coord,
                            anchor_lens, point_lens, params,
                            num_heads=H, block_rows=16)
    out = jax.block_until_ready(out)

    ref = reference_neckblock(anchor_feat, anchor_coord, point_feat, point_coord,
                              anchor_lens, point_lens, params, H)

    assert out.shape == (na, C)
    # Tolerance sized for bf16 matmul operands / bf16 inter-kernel tensors (f32
    # accumulation, f32 LN/softmax/GELU); typical max-abs error is ~5e-3.
    max_err = float(jnp.max(jnp.abs(out - ref)))
    assert jnp.allclose(out, ref, atol=5e-2, rtol=5e-2), (
        "mismatch vs JAX reference: max abs err = %e" % max_err)

    print("KERNEL_OK")
</pallas_src>

<mosaic_0001>
module attributes {stable_mosaic.version = 11 : i64} {
  func.func @_q_rope_kernel(%arg0: i32, %arg1: memref<16x48xf32, #tpu.memory_space<vmem>>, %arg2: memref<16x48xbf16, #tpu.memory_space<vmem>>, %arg3: memref<16x48xbf16, #tpu.memory_space<vmem>>, %arg4: memref<1x48xf32, #tpu.memory_space<vmem>>, %arg5: memref<1x48xf32, #tpu.memory_space<vmem>>, %arg6: memref<48x96xbf16, #tpu.memory_space<vmem>>, %arg7: memref<1x96xf32, #tpu.memory_space<vmem>>, %arg8: memref<16x48xbf16, #tpu.memory_space<vmem>>) attributes {dimension_semantics = [#tpu.dimension_semantics<parallel>], iteration_bounds = array<i64: 1>, scalar_prefetch = 0 : i64, scratch_operands = 0 : i64, tpu.core_type = #tpu.core_type<tc>, window_params = [{transform_indices = @transform_0, window_bounds = array<i64: 16, 48>}, {transform_indices = @transform_1, window_bounds = array<i64: 16, 48>}, {transform_indices = @transform_2, window_bounds = array<i64: 16, 48>}, {pipeline_mode = #tpu.pipeline_mode<synchronous>, transform_indices = @transform_3, window_bounds = array<i64: 1, 48>}, {pipeline_mode = #tpu.pipeline_mode<synchronous>, transform_indices = @transform_4, window_bounds = array<i64: 1, 48>}, {pipeline_mode = #tpu.pipeline_mode<synchronous>, transform_indices = @transform_5, window_bounds = array<i64: 48, 96>}, {pipeline_mode = #tpu.pipeline_mode<synchronous>, transform_indices = @transform_6, window_bounds = array<i64: 1, 96>}, {transform_indices = @transform_7, window_bounds = array<i64: 16, 48>}]} {
    %c0 = arith.constant 0 : index
    %c0_0 = arith.constant 0 : index
    %0 = vector.load %arg1[%c0, %c0_0] : memref<16x48xf32, #tpu.memory_space<vmem>>, vector<16x48xf32>
    %cst = arith.constant dense<0.000000e+00> : vector<16xf32>
    %1 = vector.multi_reduction <add>, %0, %cst [1] : vector<16x48xf32> to vector<16xf32>
    %2 = vector.shape_cast %1 : vector<16xf32> to vector<16x1xf32>
    %cst_1 = arith.constant 4.800000e+01 : f32
    %3 = vector.broadcast %cst_1 : f32 to vector<16x1xf32>
    %4 = arith.divf %2, %3 : vector<16x1xf32>
    %5 = vector.broadcast %4 : vector<16x1xf32> to vector<16x48xf32>
    %6 = arith.subf %0, %5 : vector<16x48xf32>
    %7 = arith.mulf %6, %6 : vector<16x48xf32>
    %cst_2 = arith.constant dense<0.000000e+00> : vector<16xf32>
    %8 = vector.multi_reduction <add>, %7, %cst_2 [1] : vector<16x48xf32> to vector<16xf32>
    %9 = vector.shape_cast %8 : vector<16xf32> to vector<16x1xf32>
    %cst_3 = arith.constant 4.800000e+01 : f32
    %10 = vector.broadcast %cst_3 : f32 to vector<16x1xf32>
    %11 = arith.divf %9, %10 : vector<16x1xf32>
    %12 = vector.broadcast %4 : vector<16x1xf32> to vector<16x48xf32>
    %13 = arith.subf %0, %12 : vector<16x48xf32>
    %cst_4 = arith.constant 9.99999974E-6 : f32
    %14 = vector.broadcast %cst_4 : f32 to vector<16x1xf32>
    %15 = arith.addf %11, %14 : vector<16x1xf32>
    %16 = math.rsqrt %15 : vector<16x1xf32>
    %17 = vector.broadcast %16 : vector<16x1xf32> to vector<16x48xf32>
    %18 = arith.mulf %13, %17 : vector<16x48xf32>
    %c0_5 = arith.constant 0 : index
    %c0_6 = arith.constant 0 : index
    %19 = vector.load %arg4[%c0_5, %c0_6] : memref<1x48xf32, #tpu.memory_space<vmem>>, vector<1x48xf32>
    %20 = vector.broadcast %19 : vector<1x48xf32> to vector<16x48xf32>
    %21 = arith.mulf %18, %20 : vector<16x48xf32>
    %c0_7 = arith.constant 0 : index
    %c0_8 = arith.constant 0 : index
    %22 = vector.load %arg5[%c0_7, %c0_8] : memref<1x48xf32, #tpu.memory_space<vmem>>, vector<1x48xf32>
    %23 = vector.broadcast %22 : vector<1x48xf32> to vector<16x48xf32>
    %24 = arith.addf %21, %23 : vector<16x48xf32>
    %25 = arith.truncf %24 : vector<16x48xf32> to vector<16x48xbf16>
    %c0_9 = arith.constant 0 : index
    %c0_10 = arith.constant 0 : index
    %26 = vector.load %arg6[%c0_9, %c0_10] : memref<48x96xbf16, #tpu.memory_space<vmem>>, vector<48x96xbf16>
    %cst_11 = arith.constant dense<0.000000e+00> : vector<16x96xf32>
    %27 = tpu.matmul %25, %26, %cst_11 {dimension_numbers = #tpu.dot_dimension_numbers<[1], [0], [0], [1], [0, 0, 1, 1], [], []>} : vector<16x48xbf16>, vector<48x96xbf16>, vector<16x96xf32> -> vector<16x96xf32>
    %c0_12 = arith.constant 0 : index
    %c0_13 = arith.constant 0 : index
    %28 = vector.load %arg7[%c0_12, %c0_13] : memref<1x96xf32, #tpu.memory_space<vmem>>, vector<1x96xf32>
    %29 = vector.broadcast %28 : vector<1x96xf32> to vector<16x96xf32>
    %30 = arith.addf %27, %29 : vector<16x96xf32>
    %31 = vector.extract_strided_slice %30 {offsets = [0, 0], sizes = [16, 48], strides = [1, 1]} : vector<16x96xf32> to vector<16x48xf32>
    %32 = vector.extract_strided_slice %30 {offsets = [0, 48], sizes = [16, 48], strides = [1, 1]} : vector<16x96xf32> to vector<16x48xf32>
    %c0_14 = arith.constant 0 : index
    %c0_15 = arith.constant 0 : index
    %33 = vector.load %arg2[%c0_14, %c0_15] : memref<16x48xbf16, #tpu.memory_space<vmem>>, vector<16x48xbf16>
    %34 = arith.extf %33 : vector<16x48xbf16> to vector<16x48xf32>
    %35 = arith.mulf %31, %34 : vector<16x48xf32>
    %c0_16 = arith.constant 0 : index
    %c0_17 = arith.constant 0 : index
    %36 = vector.load %arg3[%c0_16, %c0_17] : memref<16x48xbf16, #tpu.memory_space<vmem>>, vector<16x48xbf16>
    %37 = arith.extf %36 : vector<16x48xbf16> to vector<16x48xf32>
    %38 = arith.mulf %32, %37 : vector<16x48xf32>
    %39 = arith.addf %35, %38 : vector<16x48xf32>
    %40 = arith.truncf %39 : vector<16x48xf32> to vector<16x48xbf16>
    %c0_18 = arith.constant 0 : index
    %c0_19 = arith.constant 0 : index
    %41 = vector.load %arg8[%c0_18, %c0_19] : memref<16x48xbf16, #tpu.memory_space<vmem>>, vector<16x48xbf16>
    tpu.vector_store %arg8[%c0_18, %c0_19], %40 {strides = array<i32>} : memref<16x48xbf16, #tpu.memory_space<vmem>>, vector<16x48xbf16>,
    return
  }
  func.func @transform_0(%arg0: i32) -> (i32, i32) {
    %c0_i32 = arith.constant 0 : i32
    %c0_i32_0 = arith.constant 0 : i32
    return %arg0, %c0_i32 : i32, i32
  }
  func.func @transform_1(%arg0: i32) -> (i32, i32) {
    %c0_i32 = arith.constant 0 : i32
    %c0_i32_0 = arith.constant 0 : i32
    return %arg0, %c0_i32 : i32, i32
  }
  func.func @transform_2(%arg0: i32) -> (i32, i32) {
    %c0_i32 = arith.constant 0 : i32
    %c0_i32_0 = arith.constant 0 : i32
    return %arg0, %c0_i32 : i32, i32
  }
  func.func @transform_3(%arg0: i32) -> (i32, i32) {
    %c0_i32 = arith.constant 0 : i32
    %c0_i32_0 = arith.constant 0 : i32
    %c0_i32_1 = arith.constant 0 : i32
    return %c0_i32, %c0_i32_0 : i32, i32
  }
  func.func @transform_4(%arg0: i32) -> (i32, i32) {
    %c0_i32 = arith.constant 0 : i32
    %c0_i32_0 = arith.constant 0 : i32
    %c0_i32_1 = arith.constant 0 : i32
    return %c0_i32, %c0_i32_0 : i32, i32
  }
  func.func @transform_5(%arg0: i32) -> (i32, i32) {
    %c0_i32 = arith.constant 0 : i32
    %c0_i32_0 = arith.constant 0 : i32
    %c0_i32_1 = arith.constant 0 : i32
    return %c0_i32, %c0_i32_0 : i32, i32
  }
  func.func @transform_6(%arg0: i32) -> (i32, i32) {
    %c0_i32 = arith.constant 0 : i32
    %c0_i32_0 = arith.constant 0 : i32
    %c0_i32_1 = arith.constant 0 : i32
    return %c0_i32, %c0_i32_0 : i32, i32
  }
  func.func @transform_7(%arg0: i32) -> (i32, i32) {
    %c0_i32 = arith.constant 0 : i32
    %c0_i32_0 = arith.constant 0 : i32
    return %arg0, %c0_i32 : i32, i32
  }
}

</mosaic_0001>

<llo_original>
// kernel: tpu_custom_call.1
$region0: #{tpu_custom_call.1}
  #allocation0 [shape = 'u32[]', space=smem, size = 0x4, offset = 0x4, fixed_abs, tag = 'smem constant byte address 0x4 - core index']
  #allocation1 [shape = 'u32[144,128]{1,0:T(1,128)}', space=vmem, size = 0x12000, scoped, tag = 'internal scratch']
  %s0 = inlined_call_operand.hbm [shape: f32[16,48], index: 0, kind: input, shape index: {}]
  %s1 = inlined_call_operand.hbm [shape: bf16[16,48], index: 1, kind: input, shape index: {}]
  %s2 = inlined_call_operand.hbm [shape: bf16[16,48], index: 2, kind: input, shape index: {}]
  %s3 = inlined_call_operand.vmem [shape: f32[1,48], index: 3, kind: input, shape index: {}]
  %s4 = inlined_call_operand.vmem [shape: f32[1,48], index: 4, kind: input, shape index: {}]
  %s5 = inlined_call_operand.hbm [shape: bf16[48,96], index: 5, kind: input, shape index: {}]
  %s6 = inlined_call_operand.vmem [shape: f32[1,96], index: 6, kind: input, shape index: {}]
  %s7 = inlined_call_operand.hbm [shape: bf16[16,48], index: 7, kind: output, shape index: {}]
  %s8 = sld [smem:[#allocation0]]
  $region54: #{tpu_custom_call.1} parent=0
    _
  %s10 = ssub.s32 1, %s8
  %s11 = scalar_select 0, %s10, %s8
  $region1: #{tpu_custom_call.1} parent=0
    #allocation2 [shape = 'u8[8192]{0}', space=vmem, size = 0x2000, scoped, tag = 'input window, operand 0, single buffered']
    #allocation3 [shape = 's32[1]{0}', space=sflag, size = 0x4, scoped, tag = 'scoped memory for tpu_custom_call.1']
    #allocation4 [shape = 's32[1]{0}', space=sflag, size = 0x4, scoped, tag = 'scoped memory for tpu_custom_call.1']
    #allocation5 [shape = 'u8[4096]{0}', space=vmem, size = 0x1000, scoped, tag = 'input window, operand 1, single buffered']
    #allocation6 [shape = 's32[1]{0}', space=sflag, size = 0x4, scoped, tag = 'scoped memory for tpu_custom_call.1']
    #allocation7 [shape = 'u8[4096]{0}', space=vmem, size = 0x1000, scoped, tag = 'input window, operand 2, single buffered']
    #allocation8 [shape = 'u8[12288]{0}', space=vmem, size = 0x3000, scoped, tag = 'input window, operand 5, single buffered']
    #allocation9 [shape = 's32[1]{0}', space=sflag, size = 0x4, scoped, tag = 'scoped memory for tpu_custom_call.1']
    #allocation10 [shape = 'u8[4096]{0}', space=vmem, size = 0x1000, scoped, tag = 'output window, operand 0, single buffered']
    %12 = vsyncpa [#allocation3], 0
    %13 = vsyncpa [#allocation6], 0
    %14 = vsyncpa [#allocation9], 0
    %15 = vsyncpa [#allocation4], 0
    // Predicated region
    $region2: #{tpu_custom_call.1} parent=1 // pred_check
      _
    $region3: #{tpu_custom_call.1} parent=1 // pred_check_branch
      %17 = sbr.rel (0) target = $region5
    $region4: #{tpu_custom_call.1} parent=1 // pred_region
      %s19 = ssub.s32 256, 256
      %20 = vsyncadd [#allocation3], %s19
      %s21 = sshll.u32 [#allocation2], 4
      %s22 = int_to_ptr.vmem [resolvable:$true] %s21
      %27 = dma.hbm_to_vmem [thread:$0]  %s0, 256, %s22, [#allocation3], 128, 128, 8
    $region5: #{tpu_custom_call.1} parent=1 // pred_fallthru
      _
    // Predicated region
    $region6: #{tpu_custom_call.1} parent=1 // pred_check
      _
    $region7: #{tpu_custom_call.1} parent=1 // pred_check_branch
      %29 = sbr.rel (0) target = $region9
    $region8: #{tpu_custom_call.1} parent=1 // pred_region
      %s31 = ssub.s32 128, 128
      %32 = vsyncadd [#allocation6], %s31
      %s33 = sshll.u32 [#allocation5], 4
      %s34 = int_to_ptr.vmem [resolvable:$true] %s33
      %39 = dma.hbm_to_vmem [thread:$0]  %s1, 128, %s34, [#allocation6], 64, 64, 4
    $region9: #{tpu_custom_call.1} parent=1 // pred_fallthru
      _
    // Predicated region
    $region10: #{tpu_custom_call.1} parent=1 // pred_check
      _
    $region11: #{tpu_custom_call.1} parent=1 // pred_check_branch
      %41 = sbr.rel (0) target = $region13
    $region12: #{tpu_custom_call.1} parent=1 // pred_region
      %s43 = ssub.s32 128, 128
      %44 = vsyncadd [#allocation6], %s43
      %s45 = sshll.u32 [#allocation7], 4
      %s46 = int_to_ptr.vmem [resolvable:$true] %s45
      %51 = dma.hbm_to_vmem [thread:$0]  %s2, 128, %s46, [#allocation6], 64, 64, 4
    $region13: #{tpu_custom_call.1} parent=1 // pred_fallthru
      _
    // Predicated region
    $region14: #{tpu_custom_call.1} parent=1 // pred_check
      _
    $region15: #{tpu_custom_call.1} parent=1 // pred_check_branch
      %53 = sbr.rel (0) target = $region17
    $region16: #{tpu_custom_call.1} parent=1 // pred_region
      _
    $region17: #{tpu_custom_call.1} parent=1 // pred_fallthru
      _
    // Predicated region
    $region18: #{tpu_custom_call.1} parent=1 // pred_check
      _
    $region19: #{tpu_custom_call.1} parent=1 // pred_check_branch
      %55 = sbr.rel (0) target = $region21
    $region20: #{tpu_custom_call.1} parent=1 // pred_region
      _
    $region21: #{tpu_custom_call.1} parent=1 // pred_fallthru
      _
    // Predicated region
    $region22: #{tpu_custom_call.1} parent=1 // pred_check
      _
    $region23: #{tpu_custom_call.1} parent=1 // pred_check_branch
      %57 = sbr.rel (0) target = $region25
    $region24: #{tpu_custom_call.1} parent=1 // pred_region
      %s59 = ssub.s32 384, 384
      %60 = vsyncadd [#allocation9], %s59
      %s61 = sshll.u32 [#allocation8], 4
      %s62 = int_to_ptr.vmem [resolvable:$true] %s61
      %67 = dma.hbm_to_vmem [thread:$0]  %s5, 384, %s62, [#allocation9], 64, 64, 4
    $region25: #{tpu_custom_call.1} parent=1 // pred_fallthru
      _
    // Predicated region
    $region26: #{tpu_custom_call.1} parent=1 // pred_check
      _
    $region27: #{tpu_custom_call.1} parent=1 // pred_check_branch
      %69 = sbr.rel (0) target = $region29
    $region28: #{tpu_custom_call.1} parent=1 // pred_region
      _
    $region29: #{tpu_custom_call.1} parent=1 // pred_fallthru
      _
    // Predicated region
    $region30: #{tpu_custom_call.1} parent=1 // pred_check
      _
    $region31: #{tpu_custom_call.1} parent=1 // pred_check_branch
      %71 = sbr.rel (0) target = $region33
    $region32: #{tpu_custom_call.1} parent=1 // pred_region
      %72 = dma.done [#allocation3], 256
    $region33: #{tpu_custom_call.1} parent=1 // pred_fallthru
      _
    // Predicated region
    $region34: #{tpu_custom_call.1} parent=1 // pred_check
      _
    $region35: #{tpu_custom_call.1} parent=1 // pred_check_branch
      %74 = sbr.rel (0) target = $region37
    $region36: #{tpu_custom_call.1} parent=1 // pred_region
      %75 = dma.done [#allocation6], 128
    $region37: #{tpu_custom_call.1} parent=1 // pred_fallthru
      _
    // Predicated region
    $region38: #{tpu_custom_call.1} parent=1 // pred_check
      _
    $region39: #{tpu_custom_call.1} parent=1 // pred_check_branch
      %77 = sbr.rel (0) target = $region41
    $region40: #{tpu_custom_call.1} parent=1 // pred_region
      %78 = dma.done [#allocation6], 128
    $region41: #{tpu_custom_call.1} parent=1 // pred_fallthru
      _
    // Predicated region
    $region42: #{tpu_custom_call.1} parent=1 // pred_check
      _
    $region43: #{tpu_custom_call.1} parent=1 // pred_check_branch
      %80 = sbr.rel (0) target = $region45
    $region44: #{tpu_custom_call.1} parent=1 // pred_region
      %81 = dma.done [#allocation9], 384
    $region45: #{tpu_custom_call.1} parent=1 // pred_fallthru
      _
    %v83 = vld [vmem:[#allocation2] sm:$0xff]
    %v84 = vld [vmem:[#allocation2 + $0x8] sm:$0xff]
    %vm85 = vcmask 392192
    %v86 = vsel %vm85, %v83, 0.0
    %87 = vadd.xlane.f32.xlu0 %v86
    %v88 = vpop.xlane.xlu0 %87
    %v89 = vsel %vm85, %v84, 0.0
    %90 = vadd.xlane.f32.xlu0 %v89
    %v91 = vpop.xlane.xlu0 %90
    %v92 = vrcp.pop 48.0
    %v93 = vmul.f32 %v88, %v92
    %v94 = vmul.f32 %v91, %v92
    %v95 = vsub.f32 %v83, %v93
    %v96 = vsub.f32 %v84, %v94
    %v97 = vmul.f32 %v95, %v95
    %v98 = vmul.f32 %v96, %v96
    %v99 = vsel %vm85, %v97, 0.0
    %100 = vadd.xlane.f32.xlu0 %v99
    %v101 = vpop.xlane.xlu0 %100
    %v102 = vsel %vm85, %v98, 0.0
    %103 = vadd.xlane.f32.xlu0 %v102
    %v104 = vpop.xlane.xlu0 %103
    %v105 = vmul.f32 %v101, %v92
    %v106 = vmul.f32 %v104, %v92
    %v107 = vadd.f32 %v105, 1e-05
    %v108 = vadd.f32 %v106, 1e-05
    %v109 = vrsqrt.pop %v107
    %v110 = vrsqrt.pop %v108
    %v111 = vmul.f32 %v95, %v109
    %v112 = vmul.f32 %v96, %v110
    %v113 = vld [vmem:[%s3] sm:$0x1]
    %v115 = vlaneseq
    %v116 = vshrl.u32 %v115, 7
    %v117 = vsub.s32 0, %v116
    %v118 = vrot.slane %v113, %v117
    %v120 = vmul.f32 %v111, %v118
    %v121 = vmul.f32 %v112, %v118
    %v122 = vld [vmem:[%s4] sm:$0x1]
    %v124 = vlaneseq
    %v125 = vshrl.u32 %v124, 7
    %v126 = vsub.s32 0, %v125
    %v127 = vrot.slane %v122, %v126
    %v129 = vadd.f32 %v120, %v127
    %v130 = vadd.f32 %v121, %v127
    %v131 = vpack.c.bf16 %v130, %v129
    %v132 = vld [vmem:[#allocation8] sm:$0xf]
    %v133 = vld [vmem:[#allocation8 + $0x4] sm:$0xf]
    %v134 = vld [vmem:[#allocation8 + $0x8] sm:$0xf]
    %v135 = vld [vmem:[#allocation8 + $0xc] sm:$0xf]
    %v136 = vld [vmem:[#allocation8 + $0x10] sm:$0xf]
    %v137 = vld [vmem:[#allocation8 + $0x14] sm:$0xf]
    %v138 = vld [vmem:[%s6] sm:$0x1]
    %v140 = vlaneseq
    %v141 = vshrl.u32 %v140, 7
    %v142 = vsub.s32 0, %v141
    %v143 = vrot.slane %v138, %v142
    %v151 = vunpack.c.l.b16 %v132
    %v152 = vunpack.c.l.b16 %v133
    %v153 = vunpack.c.l.b16 %v134
    %v154 = vunpack.c.l.b16 %v135
    %v155 = vunpack.c.l.b16 %v136
    %v156 = vunpack.c.l.b16 %v137
    %v157 = vpack.c.b16 %v152, %v151
    %v158 = vpack.c.b16 %v154, %v153
    %v159 = vpack.c.b16 %v156, %v155
    %v164 = vsel %vm85, %v131, 0
    %166 = vmatprep.subr.bf16.mxu0 0
    %167 = vmatpush1.bf16.msra.mxu0 0
    %168 = vmatprep.subr.bf16.mxu0 0
    %169 = vmatpush1.bf16.msra.mxu0 0
    %170 = vmatprep.subr.bf16.mxu0 0
    %171 = vmatpush1.bf16.msra.mxu0 0
    %172 = vmatprep.subr.bf16.mxu0 0
    %173 = vmatpush1.bf16.msra.mxu0 0
    %174 = vmatprep.subr.bf16.mxu0 0
    %175 = vmatpush1.bf16.msra.mxu0 0
    %176 = vmatprep.subr.bf16.mxu0 0
    %177 = vmatpush1.bf16.msra.mxu0 %v159
    %178 = vmatprep.subr.bf16.mxu0 0
    %179 = vmatpush1.bf16.msra.mxu0 %v158
    %180 = vmatprep.subr.bf16.mxu0 0
    %181 = vmatpush1.bf16.msra.mxu0 %v157
    %182 = vmatprep.subr.bf16.mxu0 0
    %183 = vmatpush2.bf16.msra.mxu0 0
    %184 = vmatprep.subr.bf16.mxu0 0
    %185 = vmatpush2.bf16.msra.mxu0 0
    %186 = vmatprep.subr.bf16.mxu0 0
    %187 = vmatpush2.bf16.msra.mxu0 0
    %188 = vmatprep.subr.bf16.mxu0 0
    %189 = vmatpush2.bf16.msra.mxu0 0
    %190 = vmatprep.subr.bf16.mxu0 0
    %191 = vmatpush2.bf16.msra.mxu0 0
    %192 = vmatprep.subr.bf16.mxu0 0
    %193 = vmatpush2.bf16.msra.mxu0 0
    %194 = vmatprep.subr.bf16.mxu0 0
    %195 = vmatpush2.bf16.msra.mxu0 0
    %196 = vmatprep.subr.bf16.mxu0 0
    %197 = vmatpush2.bf16.msra.mxu0 0
    %198 = vmatprep.mubr.bf16.mxu0 0
    %199 = vmatmul.mubr.bf16.gmra.mxu0 %v164
    %v200 = vpop.f32.mrf.mxu0
    %v201 = vadd.f32 %v143, %v200
    %v202 = vpop.f32.mrf.mxu0
    %v203 = vpop.f32.mrf.mxu0
    %v204 = vadd.f32 %v143, %v203
    %v205 = vpop.f32.mrf.mxu0
    %206 = vdwg.mxu0
    %v207 = vld [vmem:[#allocation5] sm:$0xf]
    %v208 = vld [vmem:[#allocation5 + $0x4] sm:$0xf]
    %v209 = vunpack.c.l.bf16 %v207
    %v210 = vunpack.c.l.bf16 %v208
    %v211 = vmul.f32 %v201, %v209
    %v212 = vmul.f32 %v204, %v210
    %v213 = vld [vmem:[#allocation7] sm:$0xf]
    %v214 = vld [vmem:[#allocation7 + $0x4] sm:$0xf]
    %v215 = vunpack.c.l.bf16 %v213
    %v216 = vunpack.c.l.bf16 %v214
    %219 = vrot.lane.b32.xlu0 %v215, 48
    %v220 = vpop.permute.xlu0 %219
    %221 = vrot.lane.b32.xlu0 %v216, 48
    %v222 = vpop.permute.xlu0 %221
    %v225 = vmul.f32 %v201, %v220
    %v226 = vmul.f32 %v204, %v222
    %229 = vrot.lane.b32.xlu0 %v225, 80
    %v230 = vpop.permute.xlu0 %229
    %231 = vrot.lane.b32.xlu0 %v226, 80
    %v232 = vpop.permute.xlu0 %231
    %v235 = vadd.f32 %v211, %v230
    %v236 = vadd.f32 %v212, %v232
    %v237 = vpack.c.bf16 %v236, %v235
    %v239 = vunpack.c.l.b16 %v237
    %v240 = vunpack.c.h.b16 %v237
    %v241 = vpack.c.b16 %v239, %v239
    %v242 = vpack.c.b16 %v240, %v240
    %vm245 = vcmask 388096
    %246 = vst.msk [vmem:[#allocation10] sm:$0xf] %vm245, %v241
    %247 = vst.msk [vmem:[#allocation10 + $0x4] sm:$0xf] %vm245, %v242
    // Predicated region
    $region46: #{tpu_custom_call.1} parent=1 // pred_check
      _
    $region47: #{tpu_custom_call.1} parent=1 // pred_check_branch
      %249 = sbr.rel (0) target = $region49
    $region48: #{tpu_custom_call.1} parent=1 // pred_region
      %s251 = ssub.s32 128, 128
      %252 = vsyncadd [#allocation4], %s251
      %s253 = sshll.u32 [#allocation10], 4
      %s254 = int_to_ptr.vmem [resolvable:$true] %s253
      %259 = dma.vmem_to_hbm [thread:$0]  %s254, 128, %s7, [#allocation4], 64, 64, 4
    $region49: #{tpu_custom_call.1} parent=1 // pred_fallthru
      _
    // Predicated region
    $region50: #{tpu_custom_call.1} parent=1 // pred_check
      _
    $region51: #{tpu_custom_call.1} parent=1 // pred_check_branch
      %261 = sbr.rel (0) target = $region53
    $region52: #{tpu_custom_call.1} parent=1 // pred_region
      %262 = dma.done [#allocation4], 128
    $region53: #{tpu_custom_call.1} parent=1 // pred_fallthru
      _
    %263 = vsyncpa [#allocation3], 1
    %264 = vsyncpa [#allocation6], 1
    %265 = vsyncpa [#allocation9], 1
    %266 = vsyncpa [#allocation4], 1

</llo_original>
